<compile_context>
chip_gen: v7x
topology: tpu7x:2x2x1
jax: 0.10.0
libtpu: 0.0.40
codegen_flags: <defaults>
</compile_context>

<pallas_src>
import jax
import jax.numpy as jnp
from jax.experimental import pallas as pl
from jax.experimental.pallas import tpu as pltpu


_SMALL_INPUT_ELEMS = 4096  # below ~one good row tile the launch overhead dominates


def _make_corr2d_row_kernel(kh: int, kw: int, wo: int):
    """Row-tiled cross-correlation kernel for a fixed (kh, kw) and output width."""
    # TODO(synk): KH > 1 would need a row halo (overlapping row blocks); the
    # tutorial module uses a 1x2 kernel, so only KH == 1 is implemented here.
    assert kh == 1, "row-tiled kernel assumes KH == 1 (the module's 1x2 kernel)"

    def kernel(w_ref, b_ref, x_ref, o_ref):
        # w_ref: SMEM (kh*kw,)      f32   -- kernel weights (scalars)
        # b_ref: SMEM (1,)          f32   -- bias
        # x_ref: VMEM (TH, W)       src dtype -- row tile of the input (full width)
        # o_ref: VMEM (TH, Wo) f32  -- row tile of the EXACT output (Wo = W-kw+1)
        x = x_ref[...]                       # single VMEM load of the whole tile
        if x.dtype != jnp.float32:
            x = x.astype(jnp.float32)        # in-kernel cast (free, hidden under DMA)
        # Tap dj is a static sub-vreg lane shift of the in-register value; no
        # concat / roll / full-width wrapped temporaries are needed because the
        # output block is already exactly Wo wide.
        acc = x[:, :wo] * w_ref[0] + b_ref[0]          # tap 0 fused with bias
        for dj in range(1, kw):
            acc = acc + x[:, dj:dj + wo] * w_ref[dj]
        o_ref[...] = acc                     # exact-width store (masked last vreg only)

    return kernel


def _vmem_capacity_bytes():
    try:
        return int(pltpu.get_tpu_info().vmem_capacity_bytes)
    except Exception:
        return 64 * 1024 * 1024  # conservative (v7x-sized) fallback


def _tile_plan(H, W, Wo, in_itemsize, row_tile=None):
    """Pick the row-tile height and the scoped VMEM limit, per TPU generation."""
    vmem_cap = _vmem_capacity_bytes()
    if vmem_cap >= 96 * 1024 * 1024:        # v5e / v6e: 128 MiB VMEM, single TC
        block_budget = 10 * 1024 * 1024     # in+out bytes per grid step
        vmem_limit = 80 * 1024 * 1024
    else:                                    # v7x-class: 64 MiB VMEM per TC
        block_budget = 6 * 1024 * 1024
        vmem_limit = 48 * 1024 * 1024

    # Sublane packing: 8 rows for 32-bit, 16 for bf16/f16, 32 for 8-bit inputs.
    sub = max(8, 32 // max(1, in_itemsize))
    per_row = W * in_itemsize + Wo * 4       # one input row + one f32 output row

    if row_tile is not None:
        th = min(int(row_tile), H)           # test / tuning override
    else:
        th = max(sub, (block_budget // per_row) // sub * sub)
        # Keep >= 4 pipelined grid steps for anything bigger than a few hundred
        # KiB so input/output DMAs overlap and the "parallel" row axis can shard
        # across the two v7x TensorCores.
        if H * W * in_itemsize > 512 * 1024:
            th = min(th, max(sub, (H // 4) // sub * sub))
        if th >= H:
            th = H                           # single full-array block (always legal)

    # Make sure the double-buffered blocks fit under the scoped limit even for
    # very wide rows (while staying under ~3/4 of physical VMEM).
    # TODO(synk): for W so wide that even a minimum-height block overflows VMEM,
    # also tile along W with a (kw-1)-column halo.
    vmem_limit = min(max(vmem_limit, 2 * th * per_row + (2 << 20)),
                     (vmem_cap * 3) // 4)
    return th, int(vmem_limit)


def _corr2d_ref(x, k, b):
    """Fused pure-JAX path, matching the PyTorch corr2d loop (+ bias)."""
    xf = x.astype(jnp.float32)
    kh, kw = k.shape
    ho, wo = x.shape[0] - kh + 1, x.shape[1] - kw + 1
    acc = jnp.zeros((ho, wo), jnp.float32)
    for di in range(kh):
        for dj in range(kw):
            acc = acc + xf[di:di + ho, dj:dj + wo] * k[di, dj].astype(jnp.float32)
    return acc + b.reshape(-1)[0].astype(jnp.float32)


def conv2d_forward(x, weight, bias, *, row_tile=None, force_pallas=False):
    """Equivalent of Conv2D.forward(x) = corr2d(x, weight) + bias for a 2-D image."""
    H, W = x.shape
    kh, kw = weight.shape
    Ho, Wo = H - kh + 1, W - kw + 1

    if kh != 1:
        # TODO(synk): general KH needs a row-halo'd BlockSpec; fall back to jnp.
        return _corr2d_ref(x, weight, bias)

    if not force_pallas and H * W <= _SMALL_INPUT_ELEMS:
        # Launch + pipeline fixed cost dwarfs the work for sub-vreg images.
        return _corr2d_ref(x, weight, bias)

    w_flat = weight.reshape(-1).astype(jnp.float32)   # tiny scalar params
    b_flat = bias.reshape(-1).astype(jnp.float32)

    in_itemsize = jnp.dtype(x.dtype).itemsize
    th, vmem_limit = _tile_plan(H, W, Wo, in_itemsize, row_tile=row_tile)
    grid = (pl.cdiv(H, th),)

    return pl.pallas_call(
        _make_corr2d_row_kernel(kh, kw, Wo),
        out_shape=jax.ShapeDtypeStruct((Ho, Wo), jnp.float32),
        grid=grid,
        in_specs=[
            pl.BlockSpec(memory_space=pltpu.SMEM),          # weights (scalars)
            pl.BlockSpec(memory_space=pltpu.SMEM),          # bias (scalar)
            pl.BlockSpec((th, W), lambda i: (i, 0)),        # row-tiled input (src dtype)
        ],
        out_specs=pl.BlockSpec((th, Wo), lambda i: (i, 0)),  # exact-width output
        compiler_params=pltpu.CompilerParams(
            dimension_semantics=("parallel",),   # rows independent -> dual-TC on v7x
            vmem_limit_bytes=vmem_limit,
        ),
    )(w_flat, b_flat, x)


if __name__ == "__main__":
    key = jax.random.PRNGKey(0)
    k1, k2, k3, k4 = jax.random.split(key, 4)

    bias = jnp.zeros((1,), dtype=jnp.float32)                    # ~ torch.zeros(1)
    k_edge = jnp.array([[1.0, -1.0]], dtype=jnp.float32)         # tutorial's fixed kernel

    # --- Case 1: tutorial size (6, 8), random 1x2 kernel (module init).
    #     Default path short-circuits to jnp; force_pallas exercises the kernel too.
    x_small = jax.random.normal(k1, (6, 8), dtype=jnp.float32)
    w_rand = jax.random.uniform(k2, (1, 2), dtype=jnp.float32)   # ~ torch.rand(kernel_size)
    ref_small = _corr2d_ref(x_small, w_rand, bias)
    out_fast = jax.block_until_ready(conv2d_forward(x_small, w_rand, bias))
    out_pallas = jax.block_until_ready(
        conv2d_forward(x_small, w_rand, bias, force_pallas=True))
    assert out_fast.shape == (6, 7) and out_pallas.shape == (6, 7)
    assert jnp.allclose(out_fast, ref_small, atol=1e-5, rtol=1e-5)
    assert jnp.allclose(out_pallas, ref_small, atol=1e-5, rtol=1e-5)

    # --- Case 2: edge detector on (64, 128); row_tile=16 -> grid=(4,) pipelined.
    x_mid = jax.random.normal(k3, (64, 128), dtype=jnp.float32)
    out_mid = jax.block_until_ready(conv2d_forward(x_mid, k_edge, bias, row_tile=16))
    ref_mid = _corr2d_ref(x_mid, k_edge, bias)
    assert out_mid.shape == (64, 127)
    assert jnp.allclose(out_mid, ref_mid, atol=1e-5, rtol=1e-5)

    # --- Case 3: (200, 256) with row_tile=48 -> grid=(5,), partial last row tile
    #     (exercises Pallas's masked writeback on the final block).
    x_part = jax.random.normal(k4, (200, 256), dtype=jnp.float32)
    out_part = jax.block_until_ready(conv2d_forward(x_part, k_edge, bias, row_tile=48))
    ref_part = _corr2d_ref(x_part, k_edge, bias)
    assert out_part.shape == (200, 255)
    assert jnp.allclose(out_part, ref_part, atol=1e-5, rtol=1e-5)

    # --- Case 4: bf16 input (in-kernel cast path), sub-128-lane width, full block.
    x_bf16 = jax.random.normal(k1, (120, 96), dtype=jnp.float32).astype(jnp.bfloat16)
    out_bf = jax.block_until_ready(conv2d_forward(x_bf16, k_edge, bias))
    ref_bf = _corr2d_ref(x_bf16, k_edge, bias)
    assert out_bf.shape == (120, 95)
    assert jnp.allclose(out_bf, ref_bf, atol=1e-3, rtol=1e-3)

    print("KERNEL_OK")
</pallas_src>

<mosaic_0001>
module attributes {stable_mosaic.version = 11 : i64} {
  func.func @kernel(%arg0: i32, %arg1: memref<2xf32, #tpu.memory_space<smem>>, %arg2: memref<1xf32, #tpu.memory_space<smem>>, %arg3: memref<6x8xf32, #tpu.memory_space<vmem>>, %arg4: memref<6x7xf32, #tpu.memory_space<vmem>>) attributes {dimension_semantics = [#tpu.dimension_semantics<parallel>], iteration_bounds = array<i64: 1>, scalar_prefetch = 0 : i64, scratch_operands = 0 : i64, tpu.core_type = #tpu.core_type<tc>, window_params = [{transform_indices = @transform_0, window_bounds = array<i64: 2>}, {transform_indices = @transform_1, window_bounds = array<i64: 1>}, {transform_indices = @transform_2, window_bounds = array<i64: 6, 8>}, {transform_indices = @transform_3, window_bounds = array<i64: 6, 7>}]} {
    %c0 = arith.constant 0 : index
    %c0_0 = arith.constant 0 : index
    %0 = vector.load %arg3[%c0, %c0_0] : memref<6x8xf32, #tpu.memory_space<vmem>>, vector<6x8xf32>
    %1 = vector.extract_strided_slice %0 {offsets = [0, 0], sizes = [6, 7], strides = [1, 1]} : vector<6x8xf32> to vector<6x7xf32>
    %c0_1 = arith.constant 0 : index
    %2 = memref.load %arg1[%c0_1] : memref<2xf32, #tpu.memory_space<smem>>
    %3 = vector.broadcast %2 : f32 to vector<6x7xf32>
    %4 = arith.mulf %1, %3 : vector<6x7xf32>
    %c0_2 = arith.constant 0 : index
    %5 = memref.load %arg2[%c0_2] : memref<1xf32, #tpu.memory_space<smem>>
    %6 = vector.broadcast %5 : f32 to vector<6x7xf32>
    %7 = arith.addf %4, %6 : vector<6x7xf32>
    %8 = vector.extract_strided_slice %0 {offsets = [0, 1], sizes = [6, 7], strides = [1, 1]} : vector<6x8xf32> to vector<6x7xf32>
    %c1 = arith.constant 1 : index
    %9 = memref.load %arg1[%c1] : memref<2xf32, #tpu.memory_space<smem>>
    %10 = vector.broadcast %9 : f32 to vector<6x7xf32>
    %11 = arith.mulf %8, %10 : vector<6x7xf32>
    %12 = arith.addf %7, %11 : vector<6x7xf32>
    %c0_3 = arith.constant 0 : index
    %c0_4 = arith.constant 0 : index
    %13 = vector.load %arg4[%c0_3, %c0_4] : memref<6x7xf32, #tpu.memory_space<vmem>>, vector<6x7xf32>
    tpu.vector_store %arg4[%c0_3, %c0_4], %12 {strides = array<i32>} : memref<6x7xf32, #tpu.memory_space<vmem>>, vector<6x7xf32>,
    return
  }
  func.func @transform_0(%arg0: i32) -> i32 {
    %c0_i32 = arith.constant 0 : i32
    %c0_i32_0 = arith.constant 0 : i32
    return %c0_i32 : i32
  }
  func.func @transform_1(%arg0: i32) -> i32 {
    %c0_i32 = arith.constant 0 : i32
    %c0_i32_0 = arith.constant 0 : i32
    return %c0_i32 : i32
  }
  func.func @transform_2(%arg0: i32) -> (i32, i32) {
    %c0_i32 = arith.constant 0 : i32
    %c0_i32_0 = arith.constant 0 : i32
    return %arg0, %c0_i32 : i32, i32
  }
  func.func @transform_3(%arg0: i32) -> (i32, i32) {
    %c0_i32 = arith.constant 0 : i32
    %c0_i32_0 = arith.constant 0 : i32
    return %arg0, %c0_i32 : i32, i32
  }
}

</mosaic_0001>

<llo_original>
// kernel: tpu_custom_call.1
$region0: #{tpu_custom_call.1}
  #allocation0 [shape = 'u32[]', space=smem, size = 0x4, offset = 0x4, fixed_abs, tag = 'smem constant byte address 0x4 - core index']
  #allocation1 [shape = 'u32[144,128]{1,0:T(1,128)}', space=vmem, size = 0x12000, scoped, tag = 'internal scratch']
  #allocation2 [shape = 'f32[1]{0:T(128)S(6)}', space=smem, size = 0x200, scoped, tag = 'scoped memory for tpu_custom_call.1']
  %s0 = inlined_call_operand.vmem [shape: f32[2], index: 0, kind: input, shape index: {}]
  %s1 = inlined_call_operand.<no memory space> [shape: f32[1], index: 1, kind: input, shape index: {}]
  %s2 = inlined_call_operand.hbm [shape: f32[6,8], index: 2, kind: input, shape index: {}]
  %s3 = inlined_call_operand.hbm [shape: f32[6,7], index: 3, kind: output, shape index: {}]
  %s4 = sld [smem:[#allocation0]]
  $region30: #{tpu_custom_call.1} parent=0
    _
  %s6 = ssub.s32 1, %s4
  %s7 = scalar_select 0, %s6, %s4
  %8 = sst [smem:[#allocation2]] %s1
  $region1: #{tpu_custom_call.1} parent=0
    #allocation3 [shape = 'u8[512]{0}', space=smem, size = 0x200, scoped, tag = 'input window, operand 0, single buffered']
    #allocation4 [shape = 's32[1]{0}', space=sflag, size = 0x4, scoped, tag = 'scoped memory for tpu_custom_call.1']
    #allocation5 [shape = 's32[1]{0}', space=sflag, size = 0x4, scoped, tag = 'scoped memory for tpu_custom_call.1']
    #allocation6 [shape = 's32[1]{0}', space=sflag, size = 0x4, scoped, tag = 'scoped memory for tpu_custom_call.1']
    #allocation7 [shape = 'u8[4096]{0}', space=vmem, size = 0x1000, scoped, tag = 'input window, operand 2, single buffered']
    #allocation8 [shape = 'u8[4096]{0}', space=vmem, size = 0x1000, scoped, tag = 'output window, operand 0, single buffered']
    %9 = vsyncpa [#allocation6], 0
    %10 = vsyncpa [#allocation4], 0
    %11 = vsyncpa [#allocation5], 0
    // Predicated region
    $region2: #{tpu_custom_call.1} parent=1 // pred_check
      _
    $region3: #{tpu_custom_call.1} parent=1 // pred_check_branch
      %13 = sbr.rel (0) target = $region5
    $region4: #{tpu_custom_call.1} parent=1 // pred_region
      %s15 = ssub.s32 16, 16
      %16 = vsyncadd [#allocation6], %s15
      %s18 = sshll.u32 %s0, 4
      %s19 = int_to_ptr.vmem [resolvable:$true] %s18
      %21 = dma.vmem_to_smem %s19, 16, [#allocation3], [#allocation6]
    $region5: #{tpu_custom_call.1} parent=1 // pred_fallthru
      _
    // Predicated region
    $region6: #{tpu_custom_call.1} parent=1 // pred_check
      _
    $region7: #{tpu_custom_call.1} parent=1 // pred_check_branch
      %23 = sbr.rel (0) target = $region9
    $region8: #{tpu_custom_call.1} parent=1 // pred_region
      _
    $region9: #{tpu_custom_call.1} parent=1 // pred_fallthru
      _
    // Predicated region
    $region10: #{tpu_custom_call.1} parent=1 // pred_check
      _
    $region11: #{tpu_custom_call.1} parent=1 // pred_check_branch
      %25 = sbr.rel (0) target = $region13
    $region12: #{tpu_custom_call.1} parent=1 // pred_region
      %s27 = ssub.s32 128, 128
      %28 = vsyncadd [#allocation4], %s27
      %s30 = sshll.u32 [#allocation7], 4
      %s31 = int_to_ptr.vmem [resolvable:$true] %s30
      %33 = dma.hbm_to_vmem [thread:$0]  %s2, 128, %s31, [#allocation4]
    $region13: #{tpu_custom_call.1} parent=1 // pred_fallthru
      _
    // Predicated region
    $region14: #{tpu_custom_call.1} parent=1 // pred_check
      _
    $region15: #{tpu_custom_call.1} parent=1 // pred_check_branch
      %35 = sbr.rel (0) target = $region17
    $region16: #{tpu_custom_call.1} parent=1 // pred_region
      %36 = dma.done [#allocation6], 16
    $region17: #{tpu_custom_call.1} parent=1 // pred_fallthru
      _
    // Predicated region
    $region18: #{tpu_custom_call.1} parent=1 // pred_check
      _
    $region19: #{tpu_custom_call.1} parent=1 // pred_check_branch
      %38 = sbr.rel (0) target = $region21
    $region20: #{tpu_custom_call.1} parent=1 // pred_region
      %39 = dma.done [#allocation4], 128
    $region21: #{tpu_custom_call.1} parent=1 // pred_fallthru
      _
    %40 = sfence
    %v41 = vld [vmem:[#allocation7] sm:$0x3f]
    %s42 = sld [smem:[#allocation3]]
    %v43 = vstv %s42
    %v44 = vmul.f32 %v41, %v43
    %s45 = sld [smem:[#allocation2]]
    %v46 = vstv %s45
    %v47 = vadd.f32 %v44, %v46
    %s48 = sld [smem:[#allocation3 + $0x1]]
    %v49 = vstv %s48
    %v50 = vmul.f32 %v41, %v49
    %52 = vrot.lane.b32.xlu0 %v50, 127
    %v53 = vpop.permute.xlu0 %52
    %v55 = vadd.f32 %v47, %v53
    %vm56 = vcmask 54272
    %57 = vst.msk [vmem:[#allocation8] sm:$0x3f] %vm56, %v55
    // Predicated region
    $region22: #{tpu_custom_call.1} parent=1 // pred_check
      _
    $region23: #{tpu_custom_call.1} parent=1 // pred_check_branch
      %59 = sbr.rel (0) target = $region25
    $region24: #{tpu_custom_call.1} parent=1 // pred_region
      %s61 = ssub.s32 128, 128
      %62 = vsyncadd [#allocation5], %s61
      %s64 = sshll.u32 [#allocation8], 4
      %s65 = int_to_ptr.vmem [resolvable:$true] %s64
      %67 = dma.vmem_to_hbm [thread:$0]  %s65, 128, %s3, [#allocation5]
    $region25: #{tpu_custom_call.1} parent=1 // pred_fallthru
      _
    // Predicated region
    $region26: #{tpu_custom_call.1} parent=1 // pred_check
      _
    $region27: #{tpu_custom_call.1} parent=1 // pred_check_branch
      %69 = sbr.rel (0) target = $region29
    $region28: #{tpu_custom_call.1} parent=1 // pred_region
      %70 = dma.done [#allocation5], 128
    $region29: #{tpu_custom_call.1} parent=1 // pred_fallthru
      _
    %71 = vsyncpa [#allocation4], 1
    %72 = vsyncpa [#allocation5], 1
    %73 = vsyncpa [#allocation6], 1

</llo_original>
